<compile_context>
chip_gen: v7x
topology: tpu7x:2x2x1
jax: 0.10.0
libtpu: 0.0.40
codegen_flags: <defaults>
</compile_context>

<pallas_src>
import functools

import jax
import jax.numpy as jnp
from jax.experimental import pallas as pl
from jax.experimental.pallas import tpu as pltpu


_NEG_FILL = -1e4  # padding logit: exp(-1e4) underflows to 0 -> zero bce & zero sigmoid


def _round_up(x, m):
    return ((x + m - 1) // m) * m


def _eqlv2_kernel(inv_n, label_ref, score_ref, posw_ref, negw_ref,
                  loss_ref, posg_ref, negg_ref):
    step = pl.program_id(0)
    nsteps = pl.num_programs(0)

    @pl.when(step == 0)
    def _init():
        loss_ref[0, 0] = jnp.float32(0.0)
        posg_ref[...] = jnp.zeros_like(posg_ref)
        negg_ref[...] = jnp.zeros_like(negg_ref)

    x = score_ref[...].astype(jnp.float32)            # (TN, Cp) logits, f32 compute
    labels = label_ref[...]                           # (TN, 1) int32 (-1 for pad rows)
    tn, cp = x.shape

    # target = one-hot(label) over Cp channels (expand_label); pad rows -> all-zero
    col = jax.lax.broadcasted_iota(jnp.int32, (tn, cp), 1)
    target = (labels == col).astype(jnp.float32)

    pos_w = posw_ref[...]                             # (1, Cp) per-class weights
    neg_w = negw_ref[...]

    # one exp per element, reused by BCE log-term and sigmoid
    e = jnp.exp(-jnp.abs(x))
    bce = jnp.maximum(x, 0.0) - x * target + jnp.log1p(e)   # stable BCE-with-logits
    r = pl.reciprocal(1.0 + e, approx=True)
    prob = jnp.where(x >= 0.0, r, e * r)              # sigmoid(x)

    # weighted BCE, accumulated over all batch tiles; /N happens at finalize
    weight = neg_w + (pos_w - neg_w) * target
    loss_ref[0, 0] += jnp.sum(bce * weight)

    # collect_grad stats: grad = |prob - target| (one-hot target) =>
    #   pos stat/class = sum((1-prob)*target), neg stat/class = sum(prob*(1-target))
    # per-class pos_w / neg_w are applied once at finalize.
    pt = prob * target
    posg_ref[...] += jnp.sum(target - pt, axis=0, keepdims=True)
    negg_ref[...] += jnp.sum(prob - pt, axis=0, keepdims=True)

    @pl.when(step == nsteps - 1)
    def _finalize():
        loss_ref[0, 0] = loss_ref[0, 0] * jnp.float32(inv_n)
        posg_ref[...] = posg_ref[...] * pos_w
        negg_ref[...] = negg_ref[...] * neg_w


@jax.jit
def _eqlv2_pallas(cls_score, label, pos_w, neg_w):
    n, c = cls_score.shape
    c_pad = _round_up(c, 128)                 # lane-dense class axis
    tn = min(512, _round_up(n, 8))            # rows per tile (fits v5e scoped VMEM)
    n_pad = _round_up(n, tn)
    num_steps = n_pad // tn

    x = cls_score
    if (n_pad != n) or (c_pad != c):
        # -1e4 padding => exactly zero loss / grad contribution from pad cells
        x = jnp.pad(x, ((0, n_pad - n), (0, c_pad - c)), constant_values=_NEG_FILL)
    label2d = label.astype(jnp.int32).reshape(n, 1)
    if n_pad != n:
        label2d = jnp.pad(label2d, ((0, n_pad - n), (0, 0)), constant_values=-1)
    if c_pad != c:
        pos_w = jnp.pad(pos_w, ((0, 0), (0, c_pad - c)))
        neg_w = jnp.pad(neg_w, ((0, 0), (0, c_pad - c)))

    kernel = functools.partial(_eqlv2_kernel, 1.0 / n)

    cost = pl.CostEstimate(
        flops=12 * n_pad * c_pad,
        transcendentals=2 * n_pad * c_pad,
        bytes_accessed=n_pad * c_pad * x.dtype.itemsize + n_pad * 4 + 4 * c_pad * 4,
    )

    loss, posg, negg = pl.pallas_call(
        kernel,
        out_shape=(
            jax.ShapeDtypeStruct((1, 1), jnp.float32),       # scalar loss (SMEM)
            jax.ShapeDtypeStruct((1, c_pad), jnp.float32),   # per-class pos-grad sum
            jax.ShapeDtypeStruct((1, c_pad), jnp.float32),   # per-class neg-grad sum
        ),
        grid=(num_steps,),
        in_specs=[
            pl.BlockSpec((tn, 1), lambda i: (i, 0)),         # label tile
            pl.BlockSpec((tn, c_pad), lambda i: (i, 0)),     # logits tile (pipelined)
            pl.BlockSpec((1, c_pad), lambda i: (0, 0)),      # pos_w (resident)
            pl.BlockSpec((1, c_pad), lambda i: (0, 0)),      # neg_w (resident)
        ],
        out_specs=(
            pl.BlockSpec(memory_space=pltpu.MemorySpace.SMEM),  # scalar accumulator
            pl.BlockSpec((1, c_pad), lambda i: (0, 0)),         # resident accumulator
            pl.BlockSpec((1, c_pad), lambda i: (0, 0)),         # resident accumulator
        ),
        compiler_params=pltpu.CompilerParams(
            dimension_semantics=("arbitrary",)),
        cost_estimate=cost,
    )(label2d, x, pos_w, neg_w)

    nc = c - 1  # drop background (last) channel, matching [:-1] in collect_grad
    return loss[0, 0], posg[0, :nc], negg[0, :nc]


class EQLv2:
    """Functional JAX/Pallas port of mmdet EQLv2 loss (forward semantics)."""

    def __init__(self, use_sigmoid=True, reduction='mean', class_weight=None,
                 loss_weight=1.0, num_classes=8, gamma=12, mu=0.8, alpha=4.0,
                 vis_grad=False):
        self.use_sigmoid = use_sigmoid
        self.reduction = reduction
        self.loss_weight = loss_weight
        self.num_classes = num_classes
        self.gamma = float(gamma)
        self.mu = float(mu)
        self.alpha = float(alpha)
        # stateful grad accumulators (lazy init, mirrors the PyTorch module)
        self._pos_grad = None
        self._neg_grad = None
        self.pos_neg = None

    def _map_func(self, x):
        return 1.0 / (1.0 + jnp.exp(-self.gamma * (x - self.mu)))

    def _get_weight(self, n_c):
        if self._pos_grad is None:
            self._pos_grad = jnp.zeros((self.num_classes,), jnp.float32)
            self._neg_grad = jnp.zeros((self.num_classes,), jnp.float32)
            pos_w = jnp.ones((1, n_c), jnp.float32)
            neg_w = jnp.ones((1, n_c), jnp.float32)
        else:
            neg_w = jnp.concatenate(
                [self._map_func(self.pos_neg), jnp.ones((1,), jnp.float32)])
            pos_w = 1.0 + self.alpha * (1.0 - neg_w)
            neg_w = neg_w.reshape(1, n_c)
            pos_w = pos_w.reshape(1, n_c)
        return pos_w, neg_w

    def forward(self, cls_score, label):
        n_i, n_c = cls_score.shape
        assert n_c == self.num_classes + 1
        pos_w, neg_w = self._get_weight(n_c)

        # NOTE: no dtype cast here -- the kernel upcasts tiles on load, so bf16
        # logits stream from HBM at half the bytes of a pre-cast f32 copy.
        loss, pos_g, neg_g = _eqlv2_pallas(cls_score, label, pos_w, neg_w)

        # TODO(synk): no custom_vjp -- PyTorch detaches the collect_grad stats and
        # weights; differentiating through forward() would leak gradients through
        # the weighting path.
        self._pos_grad = self._pos_grad + pos_g
        self._neg_grad = self._neg_grad + neg_g
        self.pos_neg = self._pos_grad / (self._neg_grad + 1e-10)

        return self.loss_weight * loss

    __call__ = forward


if __name__ == "__main__":
    key = jax.random.PRNGKey(0)
    n_i = 32                       # number of RoIs / samples
    num_classes = 8
    n_c = num_classes + 1          # +1 background channel

    k1, k2 = jax.random.split(key)
    cls_score = jax.random.normal(k1, (n_i, n_c), dtype=jnp.float32)
    label = jax.random.randint(k2, (n_i,), 0, n_c, dtype=jnp.int32)

    loss_fn = EQLv2(num_classes=num_classes, gamma=12, mu=0.8, alpha=4.0,
                    loss_weight=1.0)

    # pure-JAX reference for the first call (pos_w = neg_w = ones)
    x32 = cls_score.astype(jnp.float32)
    tgt = jax.nn.one_hot(label, n_c, dtype=jnp.float32)
    bce_ref = jnp.maximum(x32, 0.0) - x32 * tgt + jnp.log1p(jnp.exp(-jnp.abs(x32)))
    ref_loss1 = jnp.sum(bce_ref) / n_i

    loss1 = loss_fn(cls_score, label)
    jax.block_until_ready(loss1)
    assert jnp.allclose(loss1, ref_loss1, rtol=1e-4, atol=1e-5), (loss1, ref_loss1)

    # second call exercises the stateful re-weighting path (map_func on pos_neg)
    loss2 = loss_fn(cls_score, label)
    jax.block_until_ready(loss2)
    assert jnp.isfinite(loss1) and jnp.isfinite(loss2)

    # bf16 logits stream natively through the same kernel (no wrapper cast)
    loss_fn_bf16 = EQLv2(num_classes=num_classes)
    loss3 = loss_fn_bf16(cls_score.astype(jnp.bfloat16), label)
    jax.block_until_ready(loss3)
    assert jnp.isfinite(loss3)

    print("KERNEL_OK")
</pallas_src>

<mosaic_0001>
module attributes {stable_mosaic.version = 11 : i64} {
  func.func @_eqlv2_kernel(%arg0: i32, %arg1: memref<32x1xi32, #tpu.memory_space<vmem>>, %arg2: memref<32x128xf32, #tpu.memory_space<vmem>>, %arg3: memref<1x128xf32, #tpu.memory_space<vmem>>, %arg4: memref<1x128xf32, #tpu.memory_space<vmem>>, %arg5: memref<1x1xf32, #tpu.memory_space<smem>>, %arg6: memref<1x128xf32, #tpu.memory_space<vmem>>, %arg7: memref<1x128xf32, #tpu.memory_space<vmem>>) attributes {dimension_semantics = [#tpu.dimension_semantics<arbitrary>], iteration_bounds = array<i64: 1>, scalar_prefetch = 0 : i64, scratch_operands = 0 : i64, tpu.core_type = #tpu.core_type<tc>, window_params = [{transform_indices = @transform_0, window_bounds = array<i64: 32, 1>}, {transform_indices = @transform_1, window_bounds = array<i64: 32, 128>}, {pipeline_mode = #tpu.pipeline_mode<synchronous>, transform_indices = @transform_2, window_bounds = array<i64: 1, 128>}, {pipeline_mode = #tpu.pipeline_mode<synchronous>, transform_indices = @transform_3, window_bounds = array<i64: 1, 128>}, {transform_indices = @transform_4, window_bounds = array<i64: 1, 1>}, {pipeline_mode = #tpu.pipeline_mode<synchronous>, transform_indices = @transform_5, window_bounds = array<i64: 1, 128>}, {pipeline_mode = #tpu.pipeline_mode<synchronous>, transform_indices = @transform_6, window_bounds = array<i64: 1, 128>}]} {
    %c0_i32 = arith.constant 0 : i32
    %0 = arith.cmpi eq, %arg0, %c0_i32 : i32
    %1 = arith.extui %0 : i1 to i32
    %c0_i32_0 = arith.constant 0 : i32
    %2 = arith.cmpi ne, %1, %c0_i32_0 : i32
    scf.if %2 {
      %cst_28 = arith.constant 0.000000e+00 : f32
      %c0_29 = arith.constant 0 : index
      %c0_30 = arith.constant 0 : index
      %58 = memref.load %arg5[%c0_29, %c0_30] : memref<1x1xf32, #tpu.memory_space<smem>>
      memref.store %cst_28, %arg5[%c0_29, %c0_30] : memref<1x1xf32, #tpu.memory_space<smem>>
      %cst_31 = arith.constant 0.000000e+00 : f32
      %59 = vector.broadcast %cst_31 : f32 to vector<1x128xf32>
      %c0_32 = arith.constant 0 : index
      %c0_33 = arith.constant 0 : index
      %60 = vector.load %arg6[%c0_32, %c0_33] : memref<1x128xf32, #tpu.memory_space<vmem>>, vector<1x128xf32>
      tpu.vector_store %arg6[%c0_32, %c0_33], %59 {strides = array<i32>} : memref<1x128xf32, #tpu.memory_space<vmem>>, vector<1x128xf32>,
      %cst_34 = arith.constant 0.000000e+00 : f32
      %61 = vector.broadcast %cst_34 : f32 to vector<1x128xf32>
      %c0_35 = arith.constant 0 : index
      %c0_36 = arith.constant 0 : index
      %62 = vector.load %arg7[%c0_35, %c0_36] : memref<1x128xf32, #tpu.memory_space<vmem>>, vector<1x128xf32>
      tpu.vector_store %arg7[%c0_35, %c0_36], %61 {strides = array<i32>} : memref<1x128xf32, #tpu.memory_space<vmem>>, vector<1x128xf32>,
    } else {
    }
    %c0 = arith.constant 0 : index
    %c0_1 = arith.constant 0 : index
    %3 = vector.load %arg2[%c0, %c0_1] : memref<32x128xf32, #tpu.memory_space<vmem>>, vector<32x128xf32>
    %c0_2 = arith.constant 0 : index
    %c0_3 = arith.constant 0 : index
    %4 = vector.load %arg1[%c0_2, %c0_3] : memref<32x1xi32, #tpu.memory_space<vmem>>, vector<32x1xi32>
    %5 = tpu.iota {dimensions = array<i32: 1>} : vector<32x128xi32>
    %6 = vector.broadcast %4 : vector<32x1xi32> to vector<32x128xi32>
    %7 = arith.cmpi eq, %6, %5 : vector<32x128xi32>
    %8 = arith.extui %7 : vector<32x128xi1> to vector<32x128xi32>
    %9 = arith.sitofp %8 : vector<32x128xi32> to vector<32x128xf32>
    %c0_4 = arith.constant 0 : index
    %c0_5 = arith.constant 0 : index
    %10 = vector.load %arg3[%c0_4, %c0_5] : memref<1x128xf32, #tpu.memory_space<vmem>>, vector<1x128xf32>
    %c0_6 = arith.constant 0 : index
    %c0_7 = arith.constant 0 : index
    %11 = vector.load %arg4[%c0_6, %c0_7] : memref<1x128xf32, #tpu.memory_space<vmem>>, vector<1x128xf32>
    %12 = math.absf %3 : vector<32x128xf32>
    %cst = arith.constant 0.000000e+00 : f32
    %13 = vector.broadcast %cst : f32 to vector<32x128xf32>
    %14 = arith.subf %13, %12 : vector<32x128xf32>
    %15 = math.exp %14 : vector<32x128xf32>
    %cst_8 = arith.constant 0.000000e+00 : f32
    %16 = vector.broadcast %cst_8 : f32 to vector<32x128xf32>
    %17 = arith.maximumf %3, %16 : vector<32x128xf32>
    %18 = arith.mulf %3, %9 : vector<32x128xf32>
    %19 = arith.subf %17, %18 : vector<32x128xf32>
    %20 = math.log1p %15 : vector<32x128xf32>
    %21 = arith.addf %19, %20 : vector<32x128xf32>
    %cst_9 = arith.constant 1.000000e+00 : f32
    %22 = vector.broadcast %cst_9 : f32 to vector<32x128xf32>
    %23 = arith.addf %22, %15 : vector<32x128xf32>
    %24 = tpu.reciprocal %23 {approx = true} : vector<32x128xf32> -> vector<32x128xf32>
    %cst_10 = arith.constant 0.000000e+00 : f32
    %25 = vector.broadcast %cst_10 : f32 to vector<32x128xf32>
    %26 = arith.cmpf oge, %3, %25 : vector<32x128xf32>
    %27 = arith.mulf %15, %24 : vector<32x128xf32>
    %28 = arith.select %26, %24, %27 : vector<32x128xi1>, vector<32x128xf32>
    %29 = arith.subf %10, %11 : vector<1x128xf32>
    %30 = vector.broadcast %29 : vector<1x128xf32> to vector<32x128xf32>
    %31 = arith.mulf %30, %9 : vector<32x128xf32>
    %32 = vector.broadcast %11 : vector<1x128xf32> to vector<32x128xf32>
    %33 = arith.addf %32, %31 : vector<32x128xf32>
    %c0_11 = arith.constant 0 : index
    %c0_12 = arith.constant 0 : index
    %34 = memref.load %arg5[%c0_11, %c0_12] : memref<1x1xf32, #tpu.memory_space<smem>>
    %35 = arith.mulf %21, %33 : vector<32x128xf32>
    %36 = vector.shape_cast %35 : vector<32x128xf32> to vector<1x32x128xf32>
    %cst_13 = arith.constant dense<0.000000e+00> : vector<1xf32>
    %37 = vector.multi_reduction <add>, %36, %cst_13 [1, 2] : vector<1x32x128xf32> to vector<1xf32>
    %38 = vector.shape_cast %37 : vector<1xf32> to vector<1x1x1xf32>
    %39 = vector.extract %38[0, 0, 0] : f32 from vector<1x1x1xf32>
    %40 = arith.addf %34, %39 : f32
    %c0_14 = arith.constant 0 : index
    %c0_15 = arith.constant 0 : index
    %41 = memref.load %arg5[%c0_14, %c0_15] : memref<1x1xf32, #tpu.memory_space<smem>>
    memref.store %40, %arg5[%c0_14, %c0_15] : memref<1x1xf32, #tpu.memory_space<smem>>
    %42 = arith.mulf %28, %9 : vector<32x128xf32>
    %c0_16 = arith.constant 0 : index
    %c0_17 = arith.constant 0 : index
    %43 = vector.load %arg6[%c0_16, %c0_17] : memref<1x128xf32, #tpu.memory_space<vmem>>, vector<1x128xf32>
    %44 = arith.subf %9, %42 : vector<32x128xf32>
    %cst_18 = arith.constant dense<0.000000e+00> : vector<128xf32>
    %45 = vector.multi_reduction <add>, %44, %cst_18 [0] : vector<32x128xf32> to vector<128xf32>
    %46 = vector.shape_cast %45 : vector<128xf32> to vector<1x128xf32>
    %47 = arith.addf %43, %46 : vector<1x128xf32>
    %c0_19 = arith.constant 0 : index
    %c0_20 = arith.constant 0 : index
    %48 = vector.load %arg6[%c0_19, %c0_20] : memref<1x128xf32, #tpu.memory_space<vmem>>, vector<1x128xf32>
    tpu.vector_store %arg6[%c0_19, %c0_20], %47 {strides = array<i32>} : memref<1x128xf32, #tpu.memory_space<vmem>>, vector<1x128xf32>,
    %c0_21 = arith.constant 0 : index
    %c0_22 = arith.constant 0 : index
    %49 = vector.load %arg7[%c0_21, %c0_22] : memref<1x128xf32, #tpu.memory_space<vmem>>, vector<1x128xf32>
    %50 = arith.subf %28, %42 : vector<32x128xf32>
    %cst_23 = arith.constant dense<0.000000e+00> : vector<128xf32>
    %51 = vector.multi_reduction <add>, %50, %cst_23 [0] : vector<32x128xf32> to vector<128xf32>
    %52 = vector.shape_cast %51 : vector<128xf32> to vector<1x128xf32>
    %53 = arith.addf %49, %52 : vector<1x128xf32>
    %c0_24 = arith.constant 0 : index
    %c0_25 = arith.constant 0 : index
    %54 = vector.load %arg7[%c0_24, %c0_25] : memref<1x128xf32, #tpu.memory_space<vmem>>, vector<1x128xf32>
    tpu.vector_store %arg7[%c0_24, %c0_25], %53 {strides = array<i32>} : memref<1x128xf32, #tpu.memory_space<vmem>>, vector<1x128xf32>,
    %c0_i32_26 = arith.constant 0 : i32
    %55 = arith.cmpi eq, %arg0, %c0_i32_26 : i32
    %56 = arith.extui %55 : i1 to i32
    %c0_i32_27 = arith.constant 0 : i32
    %57 = arith.cmpi ne, %56, %c0_i32_27 : i32
    scf.if %57 {
      %c0_28 = arith.constant 0 : index
      %c0_29 = arith.constant 0 : index
      %58 = memref.load %arg5[%c0_28, %c0_29] : memref<1x1xf32, #tpu.memory_space<smem>>
      %cst_30 = arith.constant 3.125000e-02 : f32
      %59 = arith.mulf %58, %cst_30 : f32
      %c0_31 = arith.constant 0 : index
      %c0_32 = arith.constant 0 : index
      %60 = memref.load %arg5[%c0_31, %c0_32] : memref<1x1xf32, #tpu.memory_space<smem>>
      memref.store %59, %arg5[%c0_31, %c0_32] : memref<1x1xf32, #tpu.memory_space<smem>>
      %c0_33 = arith.constant 0 : index
      %c0_34 = arith.constant 0 : index
      %61 = vector.load %arg6[%c0_33, %c0_34] : memref<1x128xf32, #tpu.memory_space<vmem>>, vector<1x128xf32>
      %62 = arith.mulf %61, %10 : vector<1x128xf32>
      %c0_35 = arith.constant 0 : index
      %c0_36 = arith.constant 0 : index
      %63 = vector.load %arg6[%c0_35, %c0_36] : memref<1x128xf32, #tpu.memory_space<vmem>>, vector<1x128xf32>
      tpu.vector_store %arg6[%c0_35, %c0_36], %62 {strides = array<i32>} : memref<1x128xf32, #tpu.memory_space<vmem>>, vector<1x128xf32>,
      %c0_37 = arith.constant 0 : index
      %c0_38 = arith.constant 0 : index
      %64 = vector.load %arg7[%c0_37, %c0_38] : memref<1x128xf32, #tpu.memory_space<vmem>>, vector<1x128xf32>
      %65 = arith.mulf %64, %11 : vector<1x128xf32>
      %c0_39 = arith.constant 0 : index
      %c0_40 = arith.constant 0 : index
      %66 = vector.load %arg7[%c0_39, %c0_40] : memref<1x128xf32, #tpu.memory_space<vmem>>, vector<1x128xf32>
      tpu.vector_store %arg7[%c0_39, %c0_40], %65 {strides = array<i32>} : memref<1x128xf32, #tpu.memory_space<vmem>>, vector<1x128xf32>,
    } else {
    }
    return
  }
  func.func @transform_0(%arg0: i32) -> (i32, i32) {
    %c0_i32 = arith.constant 0 : i32
    %c0_i32_0 = arith.constant 0 : i32
    return %arg0, %c0_i32 : i32, i32
  }
  func.func @transform_1(%arg0: i32) -> (i32, i32) {
    %c0_i32 = arith.constant 0 : i32
    %c0_i32_0 = arith.constant 0 : i32
    return %arg0, %c0_i32 : i32, i32
  }
  func.func @transform_2(%arg0: i32) -> (i32, i32) {
    %c0_i32 = arith.constant 0 : i32
    %c0_i32_0 = arith.constant 0 : i32
    %c0_i32_1 = arith.constant 0 : i32
    return %c0_i32, %c0_i32_0 : i32, i32
  }
  func.func @transform_3(%arg0: i32) -> (i32, i32) {
    %c0_i32 = arith.constant 0 : i32
    %c0_i32_0 = arith.constant 0 : i32
    %c0_i32_1 = arith.constant 0 : i32
    return %c0_i32, %c0_i32_0 : i32, i32
  }
  func.func @transform_4(%arg0: i32) -> (i32, i32) {
    %c0_i32 = arith.constant 0 : i32
    %c0_i32_0 = arith.constant 0 : i32
    %c0_i32_1 = arith.constant 0 : i32
    return %c0_i32, %c0_i32_0 : i32, i32
  }
  func.func @transform_5(%arg0: i32) -> (i32, i32) {
    %c0_i32 = arith.constant 0 : i32
    %c0_i32_0 = arith.constant 0 : i32
    %c0_i32_1 = arith.constant 0 : i32
    return %c0_i32, %c0_i32_0 : i32, i32
  }
  func.func @transform_6(%arg0: i32) -> (i32, i32) {
    %c0_i32 = arith.constant 0 : i32
    %c0_i32_0 = arith.constant 0 : i32
    %c0_i32_1 = arith.constant 0 : i32
    return %c0_i32, %c0_i32_0 : i32, i32
  }
}

</mosaic_0001>

<llo_original>
// kernel: _eqlv2_pallas.1
$region0: #{_eqlv2_pallas.1}
  #allocation0 [shape = 'u32[]', space=smem, size = 0x4, offset = 0x4, fixed_abs, tag = 'smem constant byte address 0x4 - core index']
  #allocation1 [shape = 'u32[144,128]{1,0:T(1,128)}', space=vmem, size = 0x12000, scoped, tag = 'internal scratch']
  %s0 = inlined_call_operand.vmem [shape: s32[32,1], index: 0, kind: input, shape index: {}]
  %s1 = inlined_call_operand.vmem [shape: f32[32,128], index: 1, kind: input, shape index: {}]
  %s2 = inlined_call_operand.vmem [shape: f32[1,128], index: 2, kind: input, shape index: {}]
  %s3 = inlined_call_operand.vmem [shape: f32[1,128], index: 3, kind: input, shape index: {}]
  %s4 = inlined_call_operand.hbm [shape: f32[1,1], index: 4, kind: output, shape index: {0}]
  %s5 = inlined_call_operand.vmem [shape: f32[1,128], index: 5, kind: output, shape index: {1}]
  %s6 = inlined_call_operand.vmem [shape: f32[1,128], index: 6, kind: output, shape index: {2}]
  %7 = xla_tuple %s4, %s5, %s6
  %s8 = sld [smem:[#allocation0]]
  $region50: #{_eqlv2_pallas.1} parent=0
    _
  %s10 = ssub.s32 1, %s8
  %s11 = scalar_select 0, %s10, %s8
  $region1: #{_eqlv2_pallas.1} parent=0
    #allocation2 [shape = 'u8[512]{0}', space=smem, size = 0x200, scoped, tag = 'output window, operand 0, single buffered']
    #allocation3 [shape = 's32[1]{0}', space=sflag, size = 0x4, scoped, tag = 'scoped memory for _eqlv2_pallas.1']
    %12 = vsyncpa [#allocation3], 0
    // Predicated region
    $region2: #{_eqlv2_pallas.1} parent=1 // pred_check
      _
    $region3: #{_eqlv2_pallas.1} parent=1 // pred_check_branch
      %14 = sbr.rel (0) target = $region5
    $region4: #{_eqlv2_pallas.1} parent=1 // pred_region
      _
    $region5: #{_eqlv2_pallas.1} parent=1 // pred_fallthru
      _
    // Predicated region
    $region6: #{_eqlv2_pallas.1} parent=1 // pred_check
      _
    $region7: #{_eqlv2_pallas.1} parent=1 // pred_check_branch
      %16 = sbr.rel (0) target = $region9
    $region8: #{_eqlv2_pallas.1} parent=1 // pred_region
      _
    $region9: #{_eqlv2_pallas.1} parent=1 // pred_fallthru
      _
    // Predicated region
    $region10: #{_eqlv2_pallas.1} parent=1 // pred_check
      _
    $region11: #{_eqlv2_pallas.1} parent=1 // pred_check_branch
      %18 = sbr.rel (0) target = $region13
    $region12: #{_eqlv2_pallas.1} parent=1 // pred_region
      _
    $region13: #{_eqlv2_pallas.1} parent=1 // pred_fallthru
      _
    // Predicated region
    $region14: #{_eqlv2_pallas.1} parent=1 // pred_check
      _
    $region15: #{_eqlv2_pallas.1} parent=1 // pred_check_branch
      %20 = sbr.rel (0) target = $region17
    $region16: #{_eqlv2_pallas.1} parent=1 // pred_region
      _
    $region17: #{_eqlv2_pallas.1} parent=1 // pred_fallthru
      _
    %p21 = scmp.eq.s32.totalorder 0, 0
    // Predicated region
    $region18: #{_eqlv2_pallas.1} parent=1 // pred_check
      %p22 = pneg %p21
    $region19: #{_eqlv2_pallas.1} parent=1 // pred_check_branch
      %24 = sbr.rel (%p22) target = $region21
    $region20: #{_eqlv2_pallas.1} parent=1 // pred_region
      %s25 = scalar_lea.smem [#allocation2], 0
      %26 = sst [smem:[%s25]] 0.0
      %27 = vst [vmem:[%s5] sm:$0x1] 0.0
      %28 = vst [vmem:[%s6] sm:$0x1] 0.0
    $region21: #{_eqlv2_pallas.1} parent=1 // pred_fallthru
      _
    %v29 = vld [vmem:[%s1] sm:$0xff]
    %v30 = vld [vmem:[%s1 + $0x8] sm:$0xff]
    %v31 = vld [vmem:[%s1 + $0x10] sm:$0xff]
    %v32 = vld [vmem:[%s1 + $0x18] sm:$0xff]
    %v33 = vld [vmem:[%s0] sm:$0xff]
    %v34 = vld [vmem:[%s0 + $0x8] sm:$0xff]
    %v35 = vld [vmem:[%s0 + $0x10] sm:$0xff]
    %v36 = vld [vmem:[%s0 + $0x18] sm:$0xff]
    %v37 = vlaneseq
    %v38 = vand.u32 %v37, 127
    %39 = vset.pattern.permute.xlu0 0
    %40 = vperm.xlu0 %39, %v33
    %v41 = vpop.permute.xlu0 %40
    %42 = vset.pattern.permute.xlu0 0
    %43 = vperm.xlu0 %42, %v34
    %v44 = vpop.permute.xlu0 %43
    %45 = vset.pattern.permute.xlu0 0
    %46 = vperm.xlu0 %45, %v35
    %v47 = vpop.permute.xlu0 %46
    %48 = vset.pattern.permute.xlu0 0
    %49 = vperm.xlu0 %48, %v36
    %v50 = vpop.permute.xlu0 %49
    %vm51 = vcmp.eq.s32.totalorder %v41, %v38
    %vm52 = vcmp.eq.s32.totalorder %v44, %v38
    %vm53 = vcmp.eq.s32.totalorder %v47, %v38
    %vm54 = vcmp.eq.s32.totalorder %v50, %v38
    %v55 = vsel %vm51, 1, 0
    %v56 = vsel %vm52, 1, 0
    %v57 = vsel %vm53, 1, 0
    %v58 = vsel %vm54, 1, 0
    %v59 = vcvt.s32.f32 %v55
    %v60 = vcvt.s32.f32 %v56
    %v61 = vcvt.s32.f32 %v57
    %v62 = vcvt.s32.f32 %v58
    %v63 = vld [vmem:[%s2] sm:$0x1]
    %v64 = vld [vmem:[%s3] sm:$0x1]
    %v65 = vand.u32 2147483647, %v29
    %v66 = vand.u32 2147483647, %v30
    %v67 = vand.u32 2147483647, %v31
    %v68 = vand.u32 2147483647, %v32
    %v69 = vsub.f32 0.0, %v65
    %v70 = vsub.f32 0.0, %v66
    %v71 = vsub.f32 0.0, %v67
    %v72 = vsub.f32 0.0, %v68
    %v73 = vmul.f32 %v69, 1.442695
    %v74 = vpow.pop %v73
    %v75 = vmul.f32 %v70, 1.442695
    %v76 = vpow.pop %v75
    %v77 = vmul.f32 %v71, 1.442695
    %v78 = vpow.pop %v77
    %v79 = vmul.f32 %v72, 1.442695
    %v80 = vpow.pop %v79
    %v81 = vmax.f32 %v29, 0.0
    %v82 = vmax.f32 %v30, 0.0
    %v83 = vmax.f32 %v31, 0.0
    %v84 = vmax.f32 %v32, 0.0
    %v85 = vmul.f32 %v29, %v59
    %v86 = vmul.f32 %v30, %v60
    %v87 = vmul.f32 %v31, %v61
    %v88 = vmul.f32 %v32, %v62
    %v89 = vsub.f32 %v81, %v85
    %v90 = vsub.f32 %v82, %v86
    %v91 = vsub.f32 %v83, %v87
    %v92 = vsub.f32 %v84, %v88
    %v93 = vadd.f32 %v74, 1.0
    %v94 = vlog2.pop %v93
    %v95 = vmul.f32 %v94, 0.6931472
    %v96 = vmul.f32 -0.5, %v74
    %v97 = vadd.f32 %v96, 1.0
    %v98 = vmul.f32 %v97, %v74
    %v99 = vand.u32 2147483647, %v74
    %vm100 = vcmp.lt.f32.partialorder %v99, 0.0004427343
    %v101 = vsel %vm100, %v98, %v95
    %v102 = vadd.f32 %v76, 1.0
    %v103 = vlog2.pop %v102
    %v104 = vmul.f32 %v103, 0.6931472
    %v105 = vmul.f32 -0.5, %v76
    %v106 = vadd.f32 %v105, 1.0
    %v107 = vmul.f32 %v106, %v76
    %v108 = vand.u32 2147483647, %v76
    %vm109 = vcmp.lt.f32.partialorder %v108, 0.0004427343
    %v110 = vsel %vm109, %v107, %v104
    %v111 = vadd.f32 %v78, 1.0
    %v112 = vlog2.pop %v111
    %v113 = vmul.f32 %v112, 0.6931472
    %v114 = vmul.f32 -0.5, %v78
    %v115 = vadd.f32 %v114, 1.0
    %v116 = vmul.f32 %v115, %v78
    %v117 = vand.u32 2147483647, %v78
    %vm118 = vcmp.lt.f32.partialorder %v117, 0.0004427343
    %v119 = vsel %vm118, %v116, %v113
    %v120 = vadd.f32 %v80, 1.0
    %v121 = vlog2.pop %v120
    %v122 = vmul.f32 %v121, 0.6931472
    %v123 = vmul.f32 -0.5, %v80
    %v124 = vadd.f32 %v123, 1.0
    %v125 = vmul.f32 %v124, %v80
    %v126 = vand.u32 2147483647, %v80
    %vm127 = vcmp.lt.f32.partialorder %v126, 0.0004427343
    %v128 = vsel %vm127, %v125, %v122
    %v129 = vadd.f32 %v89, %v101
    %v130 = vadd.f32 %v90, %v110
    %v131 = vadd.f32 %v91, %v119
    %v132 = vadd.f32 %v92, %v128
    %v133 = vadd.f32 %v74, 1.0
    %v134 = vadd.f32 %v76, 1.0
    %v135 = vadd.f32 %v78, 1.0
    %v136 = vadd.f32 %v80, 1.0
    %v137 = vrcp.pop %v133
    %v138 = vrcp.pop %v134
    %v139 = vrcp.pop %v135
    %v140 = vrcp.pop %v136
    %vm141 = vcmp.ge.f32.partialorder %v29, 0.0
    %vm142 = vcmp.ge.f32.partialorder %v30, 0.0
    %vm143 = vcmp.ge.f32.partialorder %v31, 0.0
    %vm144 = vcmp.ge.f32.partialorder %v32, 0.0
    %v145 = vmul.f32 %v74, %v137
    %v146 = vmul.f32 %v76, %v138
    %v147 = vmul.f32 %v78, %v139
    %v148 = vmul.f32 %v80, %v140
    %v149 = vsel %vm141, %v137, %v145
    %v150 = vsel %vm142, %v138, %v146
    %v151 = vsel %vm143, %v139, %v147
    %v152 = vsel %vm144, %v140, %v148
    %v153 = vsub.f32 %v63, %v64
    %v155 = vlaneseq
    %v156 = vshrl.u32 %v155, 7
    %v157 = vsub.s32 0, %v156
    %v158 = vrot.slane %v153, %v157
    %v160 = vmul.f32 %v158, %v59
    %v161 = vmul.f32 %v158, %v60
    %v162 = vmul.f32 %v158, %v61
    %v163 = vmul.f32 %v158, %v62
    %v165 = vlaneseq
    %v166 = vshrl.u32 %v165, 7
    %v167 = vsub.s32 0, %v166
    %v168 = vrot.slane %v64, %v167
    %v170 = vadd.f32 %v168, %v160
    %v171 = vadd.f32 %v168, %v161
    %v172 = vadd.f32 %v168, %v162
    %v173 = vadd.f32 %v168, %v163
    %s174 = sld [smem:[#allocation2]]
    %v175 = vmul.f32 %v129, %v170
    %v176 = vmul.f32 %v130, %v171
    %v177 = vmul.f32 %v131, %v172
    %v178 = vmul.f32 %v132, %v173
    %v179 = vadd.f32 %v175, %v176
    %v180 = vadd.f32 %v179, %v177
    %v181 = vadd.f32 %v180, %v178
    %182 = vadd.xlane.f32.xlu0 %v181
    %v183 = vpop.xlane.xlu0 %182
    %v184 = vrot.slane %v183, 4
    %v185 = vadd.f32 %v183, %v184
    %v186 = vrot.slane %v185, 2
    %v187 = vadd.f32 %v185, %v186
    %v188 = vrot.slane %v187, 1
    %v189 = vadd.f32 %v187, %v188
    %s190 = vtos %v189
    %s191 = sadd.f32 %s174, %s190
    %s192 = scalar_lea.smem [#allocation2], 0
    %193 = sst [smem:[%s192]] %s191
    %v194 = vmul.f32 %v149, %v59
    %v195 = vmul.f32 %v150, %v60
    %v196 = vmul.f32 %v151, %v61
    %v197 = vmul.f32 %v152, %v62
    %v198 = vld [vmem:[%s5] sm:$0x1]
    %v199 = vsub.f32 %v59, %v194
    %v200 = vsub.f32 %v60, %v195
    %v201 = vsub.f32 %v61, %v196
    %v202 = vsub.f32 %v62, %v197
    %v203 = vadd.f32 %v199, %v200
    %v204 = vadd.f32 %v203, %v201
    %v205 = vadd.f32 %v204, %v202
    %v206 = vrot.slane %v205, 4
    %v207 = vadd.f32 %v205, %v206
    %v208 = vrot.slane %v207, 2
    %v209 = vadd.f32 %v207, %v208
    %v210 = vrot.slane %v209, 1
    %v211 = vadd.f32 %v209, %v210
    %v212 = vadd.f32 %v198, %v211
    %213 = vst [vmem:[%s5] sm:$0x1] %v212
    %v214 = vld [vmem:[%s6] sm:$0x1]
    %v215 = vsub.f32 %v149, %v194
    %v216 = vsub.f32 %v150, %v195
    %v217 = vsub.f32 %v151, %v196
    %v218 = vsub.f32 %v152, %v197
    %v219 = vadd.f32 %v215, %v216
    %v220 = vadd.f32 %v219, %v217
    %v221 = vadd.f32 %v220, %v218
    %v222 = vrot.slane %v221, 4
    %v223 = vadd.f32 %v221, %v222
    %v224 = vrot.slane %v223, 2
    %v225 = vadd.f32 %v223, %v224
    %v226 = vrot.slane %v225, 1
    %v227 = vadd.f32 %v225, %v226
    %v228 = vadd.f32 %v214, %v227
    %229 = vst [vmem:[%s6] sm:$0x1] %v228
    // Predicated region
    $region22: #{_eqlv2_pallas.1} parent=1 // pred_check
      %p230 = pneg %p21
    $region23: #{_eqlv2_pallas.1} parent=1 // pred_check_branch
      %232 = sbr.rel (%p230) target = $region25
    $region24: #{_eqlv2_pallas.1} parent=1 // pred_region
      %s233 = sld [smem:[#allocation2]]
      %s234 = smul.f32 %s233, 0.03125
      %235 = sst [smem:[%s192]] %s234
      %v236 = vld [vmem:[%s5] sm:$0x1]
      %v237 = vmul.f32 %v236, %v63
      %238 = vst [vmem:[%s5] sm:$0x1] %v237
      %v239 = vld [vmem:[%s6] sm:$0x1]
      %v240 = vmul.f32 %v239, %v64
      %241 = vst [vmem:[%s6] sm:$0x1] %v240
    $region25: #{_eqlv2_pallas.1} parent=1 // pred_fallthru
      _
    // Predicated region
    $region26: #{_eqlv2_pallas.1} parent=1 // pred_check
      _
    $region27: #{_eqlv2_pallas.1} parent=1 // pred_check_branch
      %243 = sbr.rel (0) target = $region29
    $region28: #{_eqlv2_pallas.1} parent=1 // pred_region
      %s245 = ssub.s32 16, 16
      %246 = vsyncadd [#allocation3], %s245
      %249 = dma.smem_to_hbm [#allocation2], 16, %s4, [#allocation3]
    $region29: #{_eqlv2_pallas.1} parent=1 // pred_fallthru
      _
    // Predicated region
    $region30: #{_eqlv2_pallas.1} parent=1 // pred_check
      _
    $region31: #{_eqlv2_pallas.1} parent=1 // pred_check_branch
      %251 = sbr.rel (0) target = $region33
    $region32: #{_eqlv2_pallas.1} parent=1 // pred_region
      _
    $region33: #{_eqlv2_pallas.1} parent=1 // pred_fallthru
      _
    // Predicated region
    $region34: #{_eqlv2_pallas.1} parent=1 // pred_check
      _
    $region35: #{_eqlv2_pallas.1} parent=1 // pred_check_branch
      %253 = sbr.rel (0) target = $region37
    $region36: #{_eqlv2_pallas.1} parent=1 // pred_region
      _
    $region37: #{_eqlv2_pallas.1} parent=1 // pred_fallthru
      _
    // Predicated region
    $region38: #{_eqlv2_pallas.1} parent=1 // pred_check
      _
    $region39: #{_eqlv2_pallas.1} parent=1 // pred_check_branch
      %255 = sbr.rel (0) target = $region41
    $region40: #{_eqlv2_pallas.1} parent=1 // pred_region
      %256 = dma.done [#allocation3], 16
    $region41: #{_eqlv2_pallas.1} parent=1 // pred_fallthru
      _
    // Predicated region
    $region42: #{_eqlv2_pallas.1} parent=1 // pred_check
      _
    $region43: #{_eqlv2_pallas.1} parent=1 // pred_check_branch
      %258 = sbr.rel (0) target = $region45
    $region44: #{_eqlv2_pallas.1} parent=1 // pred_region
      _
    $region45: #{_eqlv2_pallas.1} parent=1 // pred_fallthru
      _
    // Predicated region
    $region46: #{_eqlv2_pallas.1} parent=1 // pred_check
      _
    $region47: #{_eqlv2_pallas.1} parent=1 // pred_check_branch
      %260 = sbr.rel (0) target = $region49
    $region48: #{_eqlv2_pallas.1} parent=1 // pred_region
      _
    $region49: #{_eqlv2_pallas.1} parent=1 // pred_fallthru
      _
    %261 = sfence
    %262 = vsyncpa [#allocation3], 1

</llo_original>
